<compile_context>
chip_gen: v5e
topology: v5e:2x2
jax: 0.10.0
libtpu: 0.0.40
codegen_flags: <defaults>
</compile_context>

<pallas_src>
import jax
import jax.numpy as jnp
from jax import lax
from jax.experimental import pallas as pl
from jax.experimental.pallas import tpu as pltpu


def _round_up(x, m):
    return ((x + m - 1) // m) * m


def _pick_tile(dim, pref, align):
    """Largest multiple of `align` <= pref that divides round_up(dim, align).

    Picking a divisor of the alignment-padded extent means we never have to
    materialize a padded copy beyond the mandatory (8,128) alignment pad, and
    when the real dim is already aligned there is no pad (no HBM copy) at all.
    """
    d = _round_up(max(dim, 1), align)
    t = min(_round_up(pref, align), d)
    while d % t:
        t -= align
    return t, d


def _pad2(a, rows, cols):
    r, c = a.shape
    if r == rows and c == cols:
        return a  # skip the per-call HBM read+write copy when already aligned
    return jnp.pad(a, ((0, rows - r), (0, cols - c)))


# x:(tm,tk) contracted with w:(tn,tk) along dim 1 -> (tm,tn); no transpose.
_CONTRACT_DIMS = (((1,), (1,)), ((), ()))


def _make_kernel(mode, single_k):
    """Build a NoisyLinear matmul kernel.

    mode: "eval"  -> W = W_mu
          "dense" -> W = W_mu + W_sigma * W_eps            (full (N,K) eps stream)
          "fact"  -> W = W_mu + W_sigma * (eps_out eps_in) (eps built in-kernel)
    single_k: the whole K extent fits in one tile -> no scratch accumulator.
    """

    def fused_weight(w_refs):
        if mode == "eval":
            (wmu_ref,) = w_refs
            return wmu_ref[...]
        if mode == "dense":
            wmu_ref, wsig_ref, weps_ref = w_refs
            return wmu_ref[...] + wsig_ref[...] * weps_ref[...]
        # "fact": epsilon tile = eps_out (tn,1) * eps_in (1,tk), VPU broadcast.
        wmu_ref, wsig_ref, ein_ref, eout_ref = w_refs
        return wmu_ref[...] + wsig_ref[...] * (eout_ref[...] * ein_ref[...])

    if single_k:
        def kernel(x_ref, *rest):
            *w_refs, b_ref, o_ref = rest
            w = fused_weight(w_refs)
            acc = lax.dot_general(x_ref[...], w,
                                  dimension_numbers=_CONTRACT_DIMS,
                                  preferred_element_type=jnp.float32)
            o_ref[...] = (acc + b_ref[...]).astype(o_ref.dtype)
        return kernel

    def kernel(x_ref, *rest):
        *w_refs, b_ref, o_ref, acc_ref = rest
        k = pl.program_id(2)

        @pl.when(k == 0)
        def _():
            acc_ref[...] = jnp.zeros_like(acc_ref)

        w = fused_weight(w_refs)
        acc_ref[...] += lax.dot_general(x_ref[...], w,
                                        dimension_numbers=_CONTRACT_DIMS,
                                        preferred_element_type=jnp.float32)

        @pl.when(k == pl.num_programs(2) - 1)
        def _():
            o_ref[...] = (acc_ref[...] + b_ref[...]).astype(o_ref.dtype)

    return kernel


def noisy_linear(x, weight_mu, bias_mu, *,
                 weight_sigma=None, bias_sigma=None,
                 eps_in=None, eps_out=None,
                 weight_epsilon=None, bias_epsilon=None,
                 training=True, stream_dtype=None,
                 tm=256, tn=256, tk=1024):
    """Pallas implementation of NoisyLinear.forward.

    x:            (B, in_features)
    weight_*:     (out_features, in_features)   (PyTorch convention)
    bias_*:       (out_features,)
    eps_in/out:   factorized noise vectors (preferred: avoids streaming the
                  dense (N, K) weight_epsilon from HBM).
    weight_epsilon/bias_epsilon: dense fallback for arbitrary noise buffers.
    stream_dtype: e.g. jnp.bfloat16 to halve weight HBM bytes (f32 accumulate).
    returns:      (B, out_features) in x.dtype
    """
    B, in_f = x.shape
    out_f, in_f2 = weight_mu.shape
    assert in_f == in_f2, "x / weight_mu shape mismatch"

    if training:
        if eps_in is not None and eps_out is not None:
            mode = "fact"
        elif weight_epsilon is not None:
            mode = "dense"
        else:
            raise ValueError("training=True requires (eps_in, eps_out) or weight_epsilon")
        assert weight_sigma is not None and bias_sigma is not None
    else:
        mode = "eval"

    out_dtype = x.dtype
    sdt = jnp.dtype(stream_dtype) if stream_dtype is not None else jnp.dtype(x.dtype)
    isz = sdt.itemsize
    out_isz = jnp.dtype(out_dtype).itemsize

    # ---- tiling (divisor tiles -> no padded weight copies beyond alignment) ----
    tm, Mp = _pick_tile(B, tm, 8)
    tn, Np = _pick_tile(out_f, tn, 128)
    tk, Kp = _pick_tile(in_f, tk, 128)

    # v7x has 2 TensorCores: keep the "parallel" (i, j) extent >= 2 when possible.
    if (Mp // tm) * (Np // tn) == 1:
        if Np >= 256 and (Np // 2) % 128 == 0:
            tn = Np // 2
        elif Mp >= 16 and (Mp // 2) % 8 == 0:
            tm = Mp // 2

    gm, gn, gk = Mp // tm, Np // tn, Kp // tk
    single_k = gk == 1

    # ---- block specs ----
    if single_k:
        x_spec = pl.BlockSpec((tm, tk), lambda i, j: (i, 0))
        w_spec = pl.BlockSpec((tn, tk), lambda i, j: (j, 0))
        b_spec = pl.BlockSpec((1, tn), lambda i, j: (0, j))
        ein_spec = pl.BlockSpec((1, tk), lambda i, j: (0, 0))
        eout_spec = pl.BlockSpec((tn, 1), lambda i, j: (j, 0))
        o_spec = pl.BlockSpec((tm, tn), lambda i, j: (i, j))
        grid = (gm, gn)
        dims = ("parallel", "parallel")
        scratch = []
    else:
        x_spec = pl.BlockSpec((tm, tk), lambda i, j, k: (i, k))
        w_spec = pl.BlockSpec((tn, tk), lambda i, j, k: (j, k))
        b_spec = pl.BlockSpec((1, tn), lambda i, j, k: (0, j))
        ein_spec = pl.BlockSpec((1, tk), lambda i, j, k: (0, k))
        eout_spec = pl.BlockSpec((tn, 1), lambda i, j, k: (j, 0))
        o_spec = pl.BlockSpec((tm, tn), lambda i, j, k: (i, j))
        grid = (gm, gn, gk)
        dims = ("parallel", "parallel", "arbitrary")
        scratch = [pltpu.VMEM((tm, tn), jnp.float32)]

    # ---- operands (bias noise fused on host: O(N), negligible) ----
    xp = _pad2(x.astype(sdt), Mp, Kp)
    wmu = _pad2(weight_mu.astype(sdt), Np, Kp)

    if mode == "eval":
        bias = bias_mu.astype(jnp.float32)
        extra_args, extra_specs, n_big = (), [], 1
    elif mode == "dense":
        assert bias_epsilon is not None
        bias = (bias_mu + bias_sigma * bias_epsilon).astype(jnp.float32)
        wsig = _pad2(weight_sigma.astype(sdt), Np, Kp)
        weps = _pad2(weight_epsilon.astype(sdt), Np, Kp)
        extra_args, extra_specs, n_big = (wsig, weps), [w_spec, w_spec], 3
    else:  # "fact"
        b_eps = bias_epsilon if bias_epsilon is not None else eps_out
        bias = (bias_mu + bias_sigma * b_eps).astype(jnp.float32)
        wsig = _pad2(weight_sigma.astype(sdt), Np, Kp)
        ein = _pad2(eps_in.astype(sdt).reshape(1, in_f), 1, Kp)
        eout = _pad2(eps_out.astype(sdt).reshape(out_f, 1), Np, 1)
        extra_args, extra_specs, n_big = (wsig, ein, eout), [w_spec, ein_spec, eout_spec], 2

    bias_row = _pad2(bias.reshape(1, out_f), 1, Np)

    args = (xp, wmu) + extra_args + (bias_row,)
    in_specs = [x_spec, w_spec] + extra_specs + [b_spec]

    # ---- advisory cost & VMEM budget ----
    cost = pl.CostEstimate(
        flops=2 * Mp * Np * Kp,
        transcendentals=0,
        bytes_accessed=(gn * Mp * Kp + gm * n_big * Np * Kp) * isz
                       + Mp * Np * out_isz + Np * 4)

    est_vmem = (2 * (tm * tk + n_big * tn * tk) * isz      # double-buffered inputs
                + 2 * tm * tn * out_isz                     # double-buffered output
                + tm * tn * 4                               # f32 accumulator
                + 2 * (tn + tk) * isz + 2 * tn * 4)         # bias / eps rows
    vmem_limit = min(2 * est_vmem, 48 * 1024 * 1024) if est_vmem > 12 * 1024 * 1024 else None

    compiler_params = pltpu.CompilerParams(
        dimension_semantics=dims, vmem_limit_bytes=vmem_limit)

    out_padded = pl.pallas_call(
        _make_kernel(mode, single_k),
        out_shape=jax.ShapeDtypeStruct((Mp, Np), out_dtype),
        grid_spec=pltpu.PrefetchScalarGridSpec(
            num_scalar_prefetch=0,
            grid=grid,
            in_specs=in_specs,
            out_specs=o_spec,
            scratch_shapes=scratch),
        compiler_params=compiler_params,
        cost_estimate=cost,
    )(*args)

    if Mp == B and Np == out_f:
        return out_padded
    return out_padded[:B, :out_f]


def init_noisy_linear_params(key, in_features, out_features, sigma_init=0.017):
    """Deterministic re-implementation of reset_parameters() + reset_noise()."""
    k_wmu, k_bmu, k_ein, k_eout = jax.random.split(key, 4)
    mu_range = 1.0 / (in_features ** 0.5)

    weight_mu = jax.random.uniform(
        k_wmu, (out_features, in_features), jnp.float32, -mu_range, mu_range)
    weight_sigma = jnp.full((out_features, in_features),
                            sigma_init / in_features ** 0.5, jnp.float32)
    bias_mu = jax.random.uniform(
        k_bmu, (out_features,), jnp.float32, -mu_range, mu_range)
    bias_sigma = jnp.full((out_features,),
                          sigma_init / out_features ** 0.5, jnp.float32)

    # Factorized Gaussian noise: f(x) = sign(x) * sqrt(|x|)
    f = lambda v: jnp.sign(v) * jnp.sqrt(jnp.abs(v))
    eps_in = f(jax.random.normal(k_ein, (in_features,), jnp.float32))
    eps_out = f(jax.random.normal(k_eout, (out_features,), jnp.float32))
    weight_epsilon = jnp.outer(eps_out, eps_in)   # (out, in)
    bias_epsilon = eps_out                        # (out,)

    return dict(weight_mu=weight_mu, weight_sigma=weight_sigma,
                weight_epsilon=weight_epsilon, bias_mu=bias_mu,
                bias_sigma=bias_sigma, bias_epsilon=bias_epsilon,
                eps_in=eps_in, eps_out=eps_out)


if __name__ == "__main__":
    key = jax.random.PRNGKey(0)

    # ---- Test 1: small shapes (single-K fast path, grid (1,1)) ----
    in_f, out_f, batch = 32, 64, 8
    k_p, k_x, key = jax.random.split(key, 3)
    p = init_noisy_linear_params(k_p, in_f, out_f)
    x = jax.random.normal(k_x, (batch, in_f), jnp.float32)

    y_fact = noisy_linear(x, p["weight_mu"], p["bias_mu"],
                          weight_sigma=p["weight_sigma"], bias_sigma=p["bias_sigma"],
                          eps_in=p["eps_in"], eps_out=p["eps_out"], training=True)
    y_dense = noisy_linear(x, p["weight_mu"], p["bias_mu"],
                           weight_sigma=p["weight_sigma"], bias_sigma=p["bias_sigma"],
                           weight_epsilon=p["weight_epsilon"],
                           bias_epsilon=p["bias_epsilon"], training=True)
    y_eval = noisy_linear(x, p["weight_mu"], p["bias_mu"], training=False)
    jax.block_until_ready((y_fact, y_dense, y_eval))

    w_ref = p["weight_mu"] + p["weight_sigma"] * p["weight_epsilon"]
    b_ref = p["bias_mu"] + p["bias_sigma"] * p["bias_epsilon"]
    ref_train = x @ w_ref.T + b_ref
    ref_eval = x @ p["weight_mu"].T + p["bias_mu"]
    assert y_fact.shape == (batch, out_f) and y_eval.shape == (batch, out_f)
    assert jnp.allclose(y_fact, ref_train, atol=1e-4, rtol=1e-5)
    assert jnp.allclose(y_dense, ref_train, atol=1e-4, rtol=1e-5)
    assert jnp.allclose(y_eval, ref_eval, atol=1e-4, rtol=1e-5)

    # ---- Test 2: multi-K accumulator path (grid (2,2,2)) ----
    in_f2, out_f2, batch2 = 256, 256, 16
    k_p2, k_x2, key = jax.random.split(key, 3)
    p2 = init_noisy_linear_params(k_p2, in_f2, out_f2)
    x2 = jax.random.normal(k_x2, (batch2, in_f2), jnp.float32)

    y2 = noisy_linear(x2, p2["weight_mu"], p2["bias_mu"],
                      weight_sigma=p2["weight_sigma"], bias_sigma=p2["bias_sigma"],
                      eps_in=p2["eps_in"], eps_out=p2["eps_out"],
                      training=True, tm=8, tn=128, tk=128)
    jax.block_until_ready(y2)

    w2_ref = p2["weight_mu"] + p2["weight_sigma"] * p2["weight_epsilon"]
    b2_ref = p2["bias_mu"] + p2["bias_sigma"] * p2["bias_epsilon"]
    ref2 = x2 @ w2_ref.T + b2_ref
    assert y2.shape == (batch2, out_f2)
    assert jnp.allclose(y2, ref2, atol=1e-4, rtol=1e-5)

    print("KERNEL_OK")
</pallas_src>

<mosaic_0001>
module attributes {stable_mosaic.version = 11 : i64} {
  func.func @kernel(%arg0: i32, %arg1: i32, %arg2: memref<8x128xf32, #tpu.memory_space<vmem>>, %arg3: memref<128x128xf32, #tpu.memory_space<vmem>>, %arg4: memref<128x128xf32, #tpu.memory_space<vmem>>, %arg5: memref<1x128xf32, #tpu.memory_space<vmem>>, %arg6: memref<128x1xf32, #tpu.memory_space<vmem>>, %arg7: memref<1x128xf32, #tpu.memory_space<vmem>>, %arg8: memref<8x128xf32, #tpu.memory_space<vmem>>) attributes {dimension_semantics = [#tpu.dimension_semantics<parallel>, #tpu.dimension_semantics<parallel>], iteration_bounds = array<i64: 1, 1>, scalar_prefetch = 0 : i64, scratch_operands = 0 : i64, tpu.core_type = #tpu.core_type<tc>, window_params = [{transform_indices = @transform_0, window_bounds = array<i64: 8, 128>}, {transform_indices = @transform_1, window_bounds = array<i64: 128, 128>}, {transform_indices = @transform_2, window_bounds = array<i64: 128, 128>}, {pipeline_mode = #tpu.pipeline_mode<synchronous>, transform_indices = @transform_3, window_bounds = array<i64: 1, 128>}, {transform_indices = @transform_4, window_bounds = array<i64: 128, 1>}, {transform_indices = @transform_5, window_bounds = array<i64: 1, 128>}, {transform_indices = @transform_6, window_bounds = array<i64: 8, 128>}]} {
    %c0 = arith.constant 0 : index
    %c0_0 = arith.constant 0 : index
    %0 = vector.load %arg3[%c0, %c0_0] : memref<128x128xf32, #tpu.memory_space<vmem>>, vector<128x128xf32>
    %c0_1 = arith.constant 0 : index
    %c0_2 = arith.constant 0 : index
    %1 = vector.load %arg4[%c0_1, %c0_2] : memref<128x128xf32, #tpu.memory_space<vmem>>, vector<128x128xf32>
    %c0_3 = arith.constant 0 : index
    %c0_4 = arith.constant 0 : index
    %2 = vector.load %arg6[%c0_3, %c0_4] : memref<128x1xf32, #tpu.memory_space<vmem>>, vector<128x1xf32>
    %c0_5 = arith.constant 0 : index
    %c0_6 = arith.constant 0 : index
    %3 = vector.load %arg5[%c0_5, %c0_6] : memref<1x128xf32, #tpu.memory_space<vmem>>, vector<1x128xf32>
    %4 = vector.broadcast %2 : vector<128x1xf32> to vector<128x128xf32>
    %5 = vector.broadcast %3 : vector<1x128xf32> to vector<128x128xf32>
    %6 = arith.mulf %4, %5 : vector<128x128xf32>
    %7 = arith.mulf %1, %6 : vector<128x128xf32>
    %8 = arith.addf %0, %7 : vector<128x128xf32>
    %c0_7 = arith.constant 0 : index
    %c0_8 = arith.constant 0 : index
    %9 = vector.load %arg2[%c0_7, %c0_8] : memref<8x128xf32, #tpu.memory_space<vmem>>, vector<8x128xf32>
    %cst = arith.constant dense<0.000000e+00> : vector<8x128xf32>
    %10 = tpu.matmul %9, %8, %cst {dimension_numbers = #tpu.dot_dimension_numbers<[1], [1], [0], [0], [0, 0, 1, 0], [], []>} : vector<8x128xf32>, vector<128x128xf32>, vector<8x128xf32> -> vector<8x128xf32>
    %c0_9 = arith.constant 0 : index
    %c0_10 = arith.constant 0 : index
    %11 = vector.load %arg7[%c0_9, %c0_10] : memref<1x128xf32, #tpu.memory_space<vmem>>, vector<1x128xf32>
    %12 = vector.broadcast %11 : vector<1x128xf32> to vector<8x128xf32>
    %13 = arith.addf %10, %12 : vector<8x128xf32>
    %c0_11 = arith.constant 0 : index
    %c0_12 = arith.constant 0 : index
    %14 = vector.load %arg8[%c0_11, %c0_12] : memref<8x128xf32, #tpu.memory_space<vmem>>, vector<8x128xf32>
    tpu.vector_store %arg8[%c0_11, %c0_12], %13 {strides = array<i32>} : memref<8x128xf32, #tpu.memory_space<vmem>>, vector<8x128xf32>,
    return
  }
  func.func @transform_0(%arg0: i32, %arg1: i32) -> (i32, i32) {
    %c0_i32 = arith.constant 0 : i32
    %c0_i32_0 = arith.constant 0 : i32
    return %arg0, %c0_i32 : i32, i32
  }
  func.func @transform_1(%arg0: i32, %arg1: i32) -> (i32, i32) {
    %c0_i32 = arith.constant 0 : i32
    %c0_i32_0 = arith.constant 0 : i32
    return %arg1, %c0_i32 : i32, i32
  }
  func.func @transform_2(%arg0: i32, %arg1: i32) -> (i32, i32) {
    %c0_i32 = arith.constant 0 : i32
    %c0_i32_0 = arith.constant 0 : i32
    return %arg1, %c0_i32 : i32, i32
  }
  func.func @transform_3(%arg0: i32, %arg1: i32) -> (i32, i32) {
    %c0_i32 = arith.constant 0 : i32
    %c0_i32_0 = arith.constant 0 : i32
    %c0_i32_1 = arith.constant 0 : i32
    return %c0_i32, %c0_i32_0 : i32, i32
  }
  func.func @transform_4(%arg0: i32, %arg1: i32) -> (i32, i32) {
    %c0_i32 = arith.constant 0 : i32
    %c0_i32_0 = arith.constant 0 : i32
    return %arg1, %c0_i32 : i32, i32
  }
  func.func @transform_5(%arg0: i32, %arg1: i32) -> (i32, i32) {
    %c0_i32 = arith.constant 0 : i32
    %c0_i32_0 = arith.constant 0 : i32
    return %c0_i32, %arg1 : i32, i32
  }
  func.func @transform_6(%arg0: i32, %arg1: i32) -> (i32, i32) {
    %c0_i32 = arith.constant 0 : i32
    return %arg0, %arg1 : i32, i32
  }
}

</mosaic_0001>

<llo_original>
// kernel: tpu_custom_call.1
$region0: #{tpu_custom_call.1}
  #allocation0 [shape = 'u32[]', space=smem, size = 0x4, offset = 0x4, fixed_abs, tag = 'smem constant byte address 0x4 - core index']
  #allocation1 [shape = 'u32[72,128]{1,0:T(1,128)}', space=vmem, size = 0x9000, scoped, tag = 'internal scratch']
  %s0 = inlined_call_operand.hbm [shape: f32[8,128], index: 0, kind: input, shape index: {}]
  %s1 = inlined_call_operand.vmem [shape: f32[128,128], index: 1, kind: input, shape index: {}]
  %s2 = inlined_call_operand.hbm [shape: f32[128,128], index: 2, kind: input, shape index: {}]
  %s3 = inlined_call_operand.vmem [shape: f32[1,128], index: 3, kind: input, shape index: {}]
  %s4 = inlined_call_operand.vmem [shape: f32[128,1], index: 4, kind: input, shape index: {}]
  %s5 = inlined_call_operand.vmem [shape: f32[1,128], index: 5, kind: input, shape index: {}]
  %s6 = inlined_call_operand.hbm [shape: f32[8,128], index: 6, kind: output, shape index: {}]
  %s7 = sld [smem:[#allocation0]]
  $region42: #{tpu_custom_call.1} parent=0
    _
  %s9 = ssub.s32 1, %s7
  %s10 = scalar_select 0, %s9, %s7
  $region1: #{tpu_custom_call.1} parent=0
    #allocation2 [shape = 'u8[4096]{0}', space=vmem, size = 0x1000, scoped, tag = 'input window, operand 0, single buffered']
    #allocation3 [shape = 's32[1]{0}', space=sflag, size = 0x4, scoped, tag = 'scoped memory for tpu_custom_call.1']
    #allocation4 [shape = 's32[1]{0}', space=sflag, size = 0x4, scoped, tag = 'scoped memory for tpu_custom_call.1']
    #allocation5 [shape = 'u8[65536]{0}', space=vmem, size = 0x10000, scoped, tag = 'input window, operand 2, single buffered']
    #allocation6 [shape = 's32[1]{0}', space=sflag, size = 0x4, scoped, tag = 'scoped memory for tpu_custom_call.1']
    #allocation7 [shape = 'u8[4096]{0}', space=vmem, size = 0x1000, scoped, tag = 'output window, operand 0, single buffered']
    %11 = vsyncpa [#allocation3], 0
    %12 = vsyncpa [#allocation6], 0
    %13 = vsyncpa [#allocation4], 0
    // Predicated region
    $region2: #{tpu_custom_call.1} parent=1 // pred_check
      _
    $region3: #{tpu_custom_call.1} parent=1 // pred_check_branch
      %15 = sbr.rel (0) target = $region5
    $region4: #{tpu_custom_call.1} parent=1 // pred_region
      %17 = vsyncadd [#allocation3], 0
      %s19 = sshll.u32 %s0, 4
      %s20 = int_to_ptr.hbm [resolvable:$true] %s19
      %s21 = sshll.u32 [#allocation2], 4
      %s22 = int_to_ptr.vmem [resolvable:$true] %s21
      %24 = dma.hbm_to_vmem [thread:$0]  %s20, 128, %s22, [#allocation3]
    $region5: #{tpu_custom_call.1} parent=1 // pred_fallthru
      _
    // Predicated region
    $region6: #{tpu_custom_call.1} parent=1 // pred_check
      _
    $region7: #{tpu_custom_call.1} parent=1 // pred_check_branch
      %26 = sbr.rel (0) target = $region9
    $region8: #{tpu_custom_call.1} parent=1 // pred_region
      _
    $region9: #{tpu_custom_call.1} parent=1 // pred_fallthru
      _
    // Predicated region
    $region10: #{tpu_custom_call.1} parent=1 // pred_check
      _
    $region11: #{tpu_custom_call.1} parent=1 // pred_check_branch
      %28 = sbr.rel (0) target = $region13
    $region12: #{tpu_custom_call.1} parent=1 // pred_region
      %30 = vsyncadd [#allocation6], 0
      %s31 = sshll.u32 %s2, 4
      %s32 = int_to_ptr.hbm [resolvable:$true] %s31
      %s33 = sshll.u32 [#allocation5], 4
      %s34 = int_to_ptr.vmem [resolvable:$true] %s33
      %39 = dma.hbm_to_vmem [thread:$0]  %s32, 2048, %s34, [#allocation6], 128, 128, 8
    $region13: #{tpu_custom_call.1} parent=1 // pred_fallthru
      _
    // Predicated region
    $region14: #{tpu_custom_call.1} parent=1 // pred_check
      _
    $region15: #{tpu_custom_call.1} parent=1 // pred_check_branch
      %41 = sbr.rel (0) target = $region17
    $region16: #{tpu_custom_call.1} parent=1 // pred_region
      _
    $region17: #{tpu_custom_call.1} parent=1 // pred_fallthru
      _
    // Predicated region
    $region18: #{tpu_custom_call.1} parent=1 // pred_check
      _
    $region19: #{tpu_custom_call.1} parent=1 // pred_check_branch
      %43 = sbr.rel (0) target = $region21
    $region20: #{tpu_custom_call.1} parent=1 // pred_region
      _
    $region21: #{tpu_custom_call.1} parent=1 // pred_fallthru
      _
    // Predicated region
    $region22: #{tpu_custom_call.1} parent=1 // pred_check
      _
    $region23: #{tpu_custom_call.1} parent=1 // pred_check_branch
      %45 = sbr.rel (0) target = $region25
    $region24: #{tpu_custom_call.1} parent=1 // pred_region
      _
    $region25: #{tpu_custom_call.1} parent=1 // pred_fallthru
      _
    // Predicated region
    $region26: #{tpu_custom_call.1} parent=1 // pred_check
      _
    $region27: #{tpu_custom_call.1} parent=1 // pred_check_branch
      %47 = sbr.rel (0) target = $region29
    $region28: #{tpu_custom_call.1} parent=1 // pred_region
      %49 = dma.done [#allocation3], 128
    $region29: #{tpu_custom_call.1} parent=1 // pred_fallthru
      _
    // Predicated region
    $region30: #{tpu_custom_call.1} parent=1 // pred_check
      _
    $region31: #{tpu_custom_call.1} parent=1 // pred_check_branch
      %51 = sbr.rel (0) target = $region33
    $region32: #{tpu_custom_call.1} parent=1 // pred_region
      %53 = dma.done [#allocation6], 2048
    $region33: #{tpu_custom_call.1} parent=1 // pred_fallthru
      _
    %v54 = vld [vmem:[%s1] sm:$0xff]
    %v55 = vld [vmem:[%s1 + $0x8] sm:$0xff]
    %v56 = vld [vmem:[%s1 + $0x10] sm:$0xff]
    %v57 = vld [vmem:[%s1 + $0x18] sm:$0xff]
    %v58 = vld [vmem:[%s1 + $0x20] sm:$0xff]
    %v59 = vld [vmem:[%s1 + $0x28] sm:$0xff]
    %v60 = vld [vmem:[%s1 + $0x30] sm:$0xff]
    %v61 = vld [vmem:[%s1 + $0x38] sm:$0xff]
    %v62 = vld [vmem:[%s1 + $0x40] sm:$0xff]
    %v63 = vld [vmem:[%s1 + $0x48] sm:$0xff]
    %v64 = vld [vmem:[%s1 + $0x50] sm:$0xff]
    %v65 = vld [vmem:[%s1 + $0x58] sm:$0xff]
    %v66 = vld [vmem:[%s1 + $0x60] sm:$0xff]
    %v67 = vld [vmem:[%s1 + $0x68] sm:$0xff]
    %v68 = vld [vmem:[%s1 + $0x70] sm:$0xff]
    %v69 = vld [vmem:[%s1 + $0x78] sm:$0xff]
    %v70 = vld [vmem:[#allocation5] sm:$0xff]
    %v71 = vld [vmem:[#allocation5 + $0x8] sm:$0xff]
    %v72 = vld [vmem:[#allocation5 + $0x10] sm:$0xff]
    %v73 = vld [vmem:[#allocation5 + $0x18] sm:$0xff]
    %v74 = vld [vmem:[#allocation5 + $0x20] sm:$0xff]
    %v75 = vld [vmem:[#allocation5 + $0x28] sm:$0xff]
    %v76 = vld [vmem:[#allocation5 + $0x30] sm:$0xff]
    %v77 = vld [vmem:[#allocation5 + $0x38] sm:$0xff]
    %v78 = vld [vmem:[#allocation5 + $0x40] sm:$0xff]
    %v79 = vld [vmem:[#allocation5 + $0x48] sm:$0xff]
    %v80 = vld [vmem:[#allocation5 + $0x50] sm:$0xff]
    %v81 = vld [vmem:[#allocation5 + $0x58] sm:$0xff]
    %v82 = vld [vmem:[#allocation5 + $0x60] sm:$0xff]
    %v83 = vld [vmem:[#allocation5 + $0x68] sm:$0xff]
    %v84 = vld [vmem:[#allocation5 + $0x70] sm:$0xff]
    %v85 = vld [vmem:[#allocation5 + $0x78] sm:$0xff]
    %v86 = vld [vmem:[%s4] sm:$0xff]
    %v87 = vld [vmem:[%s4 + $0x8] sm:$0xff]
    %v88 = vld [vmem:[%s4 + $0x10] sm:$0xff]
    %v89 = vld [vmem:[%s4 + $0x18] sm:$0xff]
    %v90 = vld [vmem:[%s4 + $0x20] sm:$0xff]
    %v91 = vld [vmem:[%s4 + $0x28] sm:$0xff]
    %v92 = vld [vmem:[%s4 + $0x30] sm:$0xff]
    %v93 = vld [vmem:[%s4 + $0x38] sm:$0xff]
    %v94 = vld [vmem:[%s4 + $0x40] sm:$0xff]
    %v95 = vld [vmem:[%s4 + $0x48] sm:$0xff]
    %v96 = vld [vmem:[%s4 + $0x50] sm:$0xff]
    %v97 = vld [vmem:[%s4 + $0x58] sm:$0xff]
    %v98 = vld [vmem:[%s4 + $0x60] sm:$0xff]
    %v99 = vld [vmem:[%s4 + $0x68] sm:$0xff]
    %v100 = vld [vmem:[%s4 + $0x70] sm:$0xff]
    %v101 = vld [vmem:[%s4 + $0x78] sm:$0xff]
    %v102 = vld [vmem:[%s3] sm:$0x1]
    %104 = vset.pattern.permute.xlu0 0
    %105 = vperm.xlu0 %104, %v86
    %v106 = vpop.permute.xlu0 %105
    %109 = vset.pattern.permute.xlu0 0
    %110 = vperm.xlu0 %109, %v87
    %v111 = vpop.permute.xlu0 %110
    %114 = vset.pattern.permute.xlu0 0
    %115 = vperm.xlu0 %114, %v88
    %v116 = vpop.permute.xlu0 %115
    %119 = vset.pattern.permute.xlu0 0
    %120 = vperm.xlu0 %119, %v89
    %v121 = vpop.permute.xlu0 %120
    %124 = vset.pattern.permute.xlu0 0
    %125 = vperm.xlu0 %124, %v90
    %v126 = vpop.permute.xlu0 %125
    %129 = vset.pattern.permute.xlu0 0
    %130 = vperm.xlu0 %129, %v91
    %v131 = vpop.permute.xlu0 %130
    %134 = vset.pattern.permute.xlu0 0
    %135 = vperm.xlu0 %134, %v92
    %v136 = vpop.permute.xlu0 %135
    %139 = vset.pattern.permute.xlu0 0
    %140 = vperm.xlu0 %139, %v93
    %v141 = vpop.permute.xlu0 %140
    %144 = vset.pattern.permute.xlu0 0
    %145 = vperm.xlu0 %144, %v94
    %v146 = vpop.permute.xlu0 %145
    %149 = vset.pattern.permute.xlu0 0
    %150 = vperm.xlu0 %149, %v95
    %v151 = vpop.permute.xlu0 %150
    %154 = vset.pattern.permute.xlu0 0
    %155 = vperm.xlu0 %154, %v96
    %v156 = vpop.permute.xlu0 %155
    %159 = vset.pattern.permute.xlu0 0
    %160 = vperm.xlu0 %159, %v97
    %v161 = vpop.permute.xlu0 %160
    %164 = vset.pattern.permute.xlu0 0
    %165 = vperm.xlu0 %164, %v98
    %v166 = vpop.permute.xlu0 %165
    %169 = vset.pattern.permute.xlu0 0
    %170 = vperm.xlu0 %169, %v99
    %v171 = vpop.permute.xlu0 %170
    %174 = vset.pattern.permute.xlu0 0
    %175 = vperm.xlu0 %174, %v100
    %v176 = vpop.permute.xlu0 %175
    %179 = vset.pattern.permute.xlu0 0
    %180 = vperm.xlu0 %179, %v101
    %v181 = vpop.permute.xlu0 %180
    %v184 = vperm.slane %v102, 0
    %v186 = vmul.f32 %v106, %v184
    %v187 = vmul.f32 %v111, %v184
    %v188 = vmul.f32 %v116, %v184
    %v189 = vmul.f32 %v121, %v184
    %v190 = vmul.f32 %v126, %v184
    %v191 = vmul.f32 %v131, %v184
    %v192 = vmul.f32 %v136, %v184
    %v193 = vmul.f32 %v141, %v184
    %v194 = vmul.f32 %v146, %v184
    %v195 = vmul.f32 %v151, %v184
    %v196 = vmul.f32 %v156, %v184
    %v197 = vmul.f32 %v161, %v184
    %v198 = vmul.f32 %v166, %v184
    %v199 = vmul.f32 %v171, %v184
    %v200 = vmul.f32 %v176, %v184
    %v201 = vmul.f32 %v181, %v184
    %v202 = vmul.f32 %v70, %v186
    %v203 = vmul.f32 %v71, %v187
    %v204 = vmul.f32 %v72, %v188
    %v205 = vmul.f32 %v73, %v189
    %v206 = vmul.f32 %v74, %v190
    %v207 = vmul.f32 %v75, %v191
    %v208 = vmul.f32 %v76, %v192
    %v209 = vmul.f32 %v77, %v193
    %v210 = vmul.f32 %v78, %v194
    %v211 = vmul.f32 %v79, %v195
    %v212 = vmul.f32 %v80, %v196
    %v213 = vmul.f32 %v81, %v197
    %v214 = vmul.f32 %v82, %v198
    %v215 = vmul.f32 %v83, %v199
    %v216 = vmul.f32 %v84, %v200
    %v217 = vmul.f32 %v85, %v201
    %v218 = vadd.f32 %v54, %v202
    %v219 = vadd.f32 %v55, %v203
    %v220 = vadd.f32 %v56, %v204
    %v221 = vadd.f32 %v57, %v205
    %v222 = vadd.f32 %v58, %v206
    %v223 = vadd.f32 %v59, %v207
    %v224 = vadd.f32 %v60, %v208
    %v225 = vadd.f32 %v61, %v209
    %v226 = vadd.f32 %v62, %v210
    %v227 = vadd.f32 %v63, %v211
    %v228 = vadd.f32 %v64, %v212
    %v229 = vadd.f32 %v65, %v213
    %v230 = vadd.f32 %v66, %v214
    %v231 = vadd.f32 %v67, %v215
    %v232 = vadd.f32 %v68, %v216
    %v233 = vadd.f32 %v69, %v217
    %v234 = vld [vmem:[#allocation2] sm:$0xff]
    %v235 = vld [vmem:[%s5] sm:$0x1]
    %v237 = vperm.slane %v235, 0
    %239 = vmatpush.xpose.msra.mxu0 %v233
    %240 = vmatpush.xpose.msra.mxu0 %v232
    %241 = vmatpush.xpose.msra.mxu0 %v231
    %242 = vmatpush.xpose.msra.mxu0 %v230
    %243 = vmatpush.xpose.msra.mxu0 %v229
    %244 = vmatpush.xpose.msra.mxu0 %v228
    %245 = vmatpush.xpose.msra.mxu0 %v227
    %246 = vmatpush.xpose.msra.mxu0 %v226
    %247 = vmatpush.xpose.msra.mxu0 %v225
    %248 = vmatpush.xpose.msra.mxu0 %v224
    %249 = vmatpush.xpose.msra.mxu0 %v223
    %250 = vmatpush.xpose.msra.mxu0 %v222
    %251 = vmatpush.xpose.msra.mxu0 %v221
    %252 = vmatpush.xpose.msra.mxu0 %v220
    %253 = vmatpush.xpose.msra.mxu0 %v219
    %254 = vmatpush.xpose.msra.mxu0 %v218
    %255 = vmatmul.f32.gmra.mxu0 %v234
    %v256 = vpop.f32.mrf.mxu0
    %v257 = vadd.f32 %v237, %v256
    %258 = vdwg.mxu0
    %259 = vst [vmem:[#allocation7] sm:$0xff] %v257
    // Predicated region
    $region34: #{tpu_custom_call.1} parent=1 // pred_check
      _
    $region35: #{tpu_custom_call.1} parent=1 // pred_check_branch
      %261 = sbr.rel (0) target = $region37
    $region36: #{tpu_custom_call.1} parent=1 // pred_region
      %263 = vsyncadd [#allocation4], 0
      %s265 = sshll.u32 [#allocation7], 4
      %s266 = int_to_ptr.vmem [resolvable:$true] %s265
      %s267 = sshll.u32 %s6, 4
      %s268 = int_to_ptr.hbm [resolvable:$true] %s267
      %270 = dma.vmem_to_hbm [thread:$0]  %s266, 128, %s268, [#allocation4]
    $region37: #{tpu_custom_call.1} parent=1 // pred_fallthru
      _
    // Predicated region
    $region38: #{tpu_custom_call.1} parent=1 // pred_check
      _
    $region39: #{tpu_custom_call.1} parent=1 // pred_check_branch
      %272 = sbr.rel (0) target = $region41
    $region40: #{tpu_custom_call.1} parent=1 // pred_region
      %274 = dma.done [#allocation4], 128
    $region41: #{tpu_custom_call.1} parent=1 // pred_fallthru
      _
    %275 = vsyncpa [#allocation3], 1
    %276 = vsyncpa [#allocation6], 1
    %277 = vsyncpa [#allocation4], 1

</llo_original>
